<compile_context>
chip_gen: v7x
topology: tpu7x:2x2x1
jax: 0.10.0
libtpu: 0.0.40
codegen_flags: <defaults>
</compile_context>

<pallas_src>
import jax
import jax.numpy as jnp
from jax.experimental import pallas as pl
from jax.experimental.pallas import tpu as pltpu


# ----------------------------------------------------------------------------
# Kernels: direct HBM->HBM DMA copies (no VMEM staging, no grid).
# ----------------------------------------------------------------------------

def _dma_copy_x_kernel(x_ref, xo_ref, sem):
    cp = pltpu.make_async_copy(x_ref, xo_ref, sem)
    cp.start()
    cp.wait()


def _dma_copy_x_logp_kernel(x_ref, lp_ref, xo_ref, lpo_ref, sems):
    cx = pltpu.make_async_copy(x_ref, xo_ref, sems.at[0])
    cl = pltpu.make_async_copy(lp_ref, lpo_ref, sems.at[1])
    cx.start()   # issue both DMAs so they overlap on the DMA engines
    cl.start()
    cx.wait()
    cl.wait()


# ----------------------------------------------------------------------------
# Wrapper
# ----------------------------------------------------------------------------

def _as_2d(a):
    """Lane-dense 2-D view for the DMA (handles 0-D / 1-D logp or x)."""
    if a.ndim >= 2:
        return a, a.shape
    return a.reshape(1, -1), a.shape


def _materialize(x, logp=None):
    """Copy x (and optionally logp) into fresh buffers via HBM->HBM DMA."""
    any_spec = pl.BlockSpec(memory_space=pl.ANY)
    params = pltpu.CompilerParams(has_side_effects=True)

    x2, x_shape = _as_2d(x)

    if logp is None:
        x_out = pl.pallas_call(
            _dma_copy_x_kernel,
            out_shape=jax.ShapeDtypeStruct(x2.shape, x2.dtype),
            in_specs=[any_spec],
            out_specs=any_spec,
            scratch_shapes=[pltpu.SemaphoreType.DMA(())],
            compiler_params=params,
        )(x2)
        return x_out.reshape(x_shape), None

    lp2, lp_shape = _as_2d(logp)
    x_out, lp_out = pl.pallas_call(
        _dma_copy_x_logp_kernel,
        out_shape=(jax.ShapeDtypeStruct(x2.shape, x2.dtype),
                   jax.ShapeDtypeStruct(lp2.shape, lp2.dtype)),
        in_specs=[any_spec, any_spec],
        out_specs=(any_spec, any_spec),
        scratch_shapes=[pltpu.SemaphoreType.DMA((2,))],
        compiler_params=params,
    )(x2, lp2)
    return x_out.reshape(x_shape), lp_out.reshape(lp_shape)


class DynamicModel:
    """JAX/Pallas port of the PyTorch DynamicModel base class."""

    def __init__(self, dim, dt=0.01):
        self.dim = dim
        self.dt = dt

    def forward(self, x, logp=None, reverse=False, materialize=False):
        # Reference semantics: identity pass-through of (x, logp); `reverse`
        # is accepted but unused, exactly as in the PyTorch module.
        if not materialize:
            # Highest-value optimization: no kernel, no HBM round-trip.
            return x, logp
        return _materialize(x, logp)

    def backward(self, z, logp=None, materialize=False):
        return self.forward(z, logp, materialize=materialize)

    # TODO(synk): velocity / first_Taylor_dyn / step_forward / evolve /
    # generate_trj* / conditional_distribution depend on subclass-defined
    # dynamics (self.var, velocity) and torch.distributions sampling, so they
    # are intentionally not implemented in this base module.


if __name__ == "__main__":
    key = jax.random.PRNGKey(0)
    kx, kl = jax.random.split(key)

    batch, dim = 2, 4
    x = jax.random.normal(kx, (batch, dim), dtype=jnp.float32)
    logp = jax.random.normal(kl, (batch,), dtype=jnp.float32)

    model = DynamicModel(dim=dim, dt=0.01)

    # Default (optimized) path: zero-copy identity.
    x_id, logp_id = model.forward(x, logp)
    assert x_id is x and logp_id is logp

    # Materialized path: one fused Pallas call doing HBM->HBM DMA copies.
    x_out, logp_out = model.forward(x, logp, materialize=True)
    jax.block_until_ready(x_out)
    jax.block_until_ready(logp_out)
    assert x_out.shape == x.shape and x_out.dtype == x.dtype
    assert logp_out.shape == logp.shape and logp_out.dtype == logp.dtype
    assert bool(jnp.all(x_out == x)) and bool(jnp.all(logp_out == logp))

    # Materialized path without logp (exercises the x-only DMA kernel).
    x_only, none_lp = model.forward(x, materialize=True)
    jax.block_until_ready(x_only)
    assert none_lp is None and bool(jnp.all(x_only == x))

    print("KERNEL_OK")
</pallas_src>

<mosaic_0001>
module attributes {stable_mosaic.version = 11 : i64} {
  func.func @_dma_copy_x_logp_kernel(%arg0: memref<2x4xf32, #tpu.memory_space<any>>, %arg1: memref<1x2xf32, #tpu.memory_space<any>>, %arg2: memref<2x4xf32, #tpu.memory_space<any>>, %arg3: memref<1x2xf32, #tpu.memory_space<any>>, %arg4: memref<2x!tpu.dma_semaphore, #tpu.memory_space<semaphore_mem>>) attributes {dimension_semantics = [], scalar_prefetch = 0 : i64, scratch_operands = 1 : i64, tpu.core_type = #tpu.core_type<tc>} {
    %c0_i32 = arith.constant 0 : i32
    %0 = tpu.memref_slice %arg4[%c0_i32] : memref<2x!tpu.dma_semaphore, #tpu.memory_space<semaphore_mem>> -> memref<1x!tpu.dma_semaphore, #tpu.memory_space<semaphore_mem>>
    %1 = tpu.memref_squeeze %0 : memref<1x!tpu.dma_semaphore, #tpu.memory_space<semaphore_mem>> -> memref<!tpu.dma_semaphore, #tpu.memory_space<semaphore_mem>>
    tpu.enqueue_dma source(%arg0 : memref<2x4xf32, #tpu.memory_space<any>>) target(%arg2 : memref<2x4xf32, #tpu.memory_space<any>>) target_semaphore(%1 : memref<!tpu.dma_semaphore, #tpu.memory_space<semaphore_mem>>)
    %c1_i32 = arith.constant 1 : i32
    %2 = tpu.memref_slice %arg4[%c1_i32] : memref<2x!tpu.dma_semaphore, #tpu.memory_space<semaphore_mem>> -> memref<1x!tpu.dma_semaphore, #tpu.memory_space<semaphore_mem>>
    %3 = tpu.memref_squeeze %2 : memref<1x!tpu.dma_semaphore, #tpu.memory_space<semaphore_mem>> -> memref<!tpu.dma_semaphore, #tpu.memory_space<semaphore_mem>>
    tpu.enqueue_dma source(%arg1 : memref<1x2xf32, #tpu.memory_space<any>>) target(%arg3 : memref<1x2xf32, #tpu.memory_space<any>>) target_semaphore(%3 : memref<!tpu.dma_semaphore, #tpu.memory_space<semaphore_mem>>)
    %c0_i32_0 = arith.constant 0 : i32
    %4 = tpu.memref_slice %arg4[%c0_i32_0] : memref<2x!tpu.dma_semaphore, #tpu.memory_space<semaphore_mem>> -> memref<1x!tpu.dma_semaphore, #tpu.memory_space<semaphore_mem>>
    %5 = tpu.memref_squeeze %4 : memref<1x!tpu.dma_semaphore, #tpu.memory_space<semaphore_mem>> -> memref<!tpu.dma_semaphore, #tpu.memory_space<semaphore_mem>>
    tpu.wait_dma2 semaphore(%5 : memref<!tpu.dma_semaphore, #tpu.memory_space<semaphore_mem>>) src(%arg0 : memref<2x4xf32, #tpu.memory_space<any>>) dst(%arg2 : memref<2x4xf32, #tpu.memory_space<any>>)
    %c1_i32_1 = arith.constant 1 : i32
    %6 = tpu.memref_slice %arg4[%c1_i32_1] : memref<2x!tpu.dma_semaphore, #tpu.memory_space<semaphore_mem>> -> memref<1x!tpu.dma_semaphore, #tpu.memory_space<semaphore_mem>>
    %7 = tpu.memref_squeeze %6 : memref<1x!tpu.dma_semaphore, #tpu.memory_space<semaphore_mem>> -> memref<!tpu.dma_semaphore, #tpu.memory_space<semaphore_mem>>
    tpu.wait_dma2 semaphore(%7 : memref<!tpu.dma_semaphore, #tpu.memory_space<semaphore_mem>>) src(%arg1 : memref<1x2xf32, #tpu.memory_space<any>>) dst(%arg3 : memref<1x2xf32, #tpu.memory_space<any>>)
    return
  }
}

</mosaic_0001>

<llo_original>
// kernel: tpu_custom_call.1
$region0: #{tpu_custom_call.1}
  #allocation0 [shape = 'u32[]', space=smem, size = 0x4, offset = 0x4, fixed_abs, tag = 'smem constant byte address 0x4 - core index']
  #allocation1 [shape = 'u32[144,128]{1,0:T(1,128)}', space=vmem, size = 0x12000, scoped, tag = 'internal scratch']
  #allocation2 [shape = 's32[2]{0}', space=sflag, size = 0x8, scoped, tag = 'scratch operand']
  #allocation3 [shape = 's32[]', space=sflag, size = 0x4, offset = 0, fixed_abs, tag = 'sflag constant byte address 0x0 - dummy sync flag']
  #allocation4 [shape = 'u32[0]{0}', space=smem, size = 0, offset = 0, fixed_abs, tag = 'smem constant byte address 0x0 - null']
  #allocation5 [shape = 's32[]', space=sflag, size = 0x4, offset = 0, fixed_abs, tag = 'sflag constant byte address 0x0 - dummy sync flag']
  #allocation6 [shape = 's32[]', space=sflag, size = 0x4, offset = 0, fixed_abs, tag = 'sflag constant byte address 0x0 - dummy sync flag']
  #allocation7 [shape = 'u32[]', space=smem, size = 0x4, offset = 0x44, fixed_abs, tag = 'smem constant byte address 0x44 - assertion arg 0']
  #allocation8 [shape = 'u32[]', space=smem, size = 0x4, offset = 0x48, fixed_abs, tag = 'smem constant byte address 0x48 - assertion arg 1']
  %s0 = inlined_call_operand.hbm [shape: f32[2,4], index: 0, kind: input, shape index: {}]
  %s1 = inlined_call_operand.vmem [shape: f32[1,2], index: 1, kind: input, shape index: {}]
  %s2 = inlined_call_operand.hbm [shape: f32[2,4], index: 2, kind: output, shape index: {0}]
  %s3 = inlined_call_operand.hbm [shape: f32[1,2], index: 3, kind: output, shape index: {1}]
  %4 = xla_tuple %s2, %s3
  %s5 = sld [smem:[#allocation0]]
  $region6: #{tpu_custom_call.1} parent=0
    _
  %s7 = ssub.s32 1, %s5
  %s8 = scalar_select 0, %s7, %s5
  %s10 = sshll.u32 1, 14
  %s11 = sxor.u32 4294967295, %s10
  %s14 = sshll.u32 3, 24
  %s15 = sxor.u32 4294967295, %s14
  %s16 = sand.u32 0, %s15
  %s18 = sor.u32 %s16, 0
  %21 = dma.general %s0, 32, %s2, [#allocation2], [#allocation3], [#allocation4], %s18, 0
  %s22 = scalar_lea.sflag [#allocation2], 1
  // Predicated region
  $region2: #{tpu_custom_call.1} parent=0 // pred_check
    _
  $region3: #{tpu_custom_call.1} parent=0 // pred_check_branch
    %24 = sbr.rel target = $region5
  $region4: #{tpu_custom_call.1} parent=0 // pred_region
    %25 = sst [smem:[#allocation7]] [#allocation6]
    %26 = sst [smem:[#allocation8]] [#allocation5]
  $region5: #{tpu_custom_call.1} parent=0 // pred_fallthru
    _
  %28 = shalt.err (0)
  %s30 = sshll.u32 %s1, 4
  %s31 = int_to_ptr.vmem [resolvable:$true] %s30
  %33 = dma.vmem_to_hbm [thread:$0]  %s31, 16, %s3, %s22
  %s34 = smul.u32 2, 1
  %s35 = sshll.u32 %s34, 4
  %36 = dma.done [#allocation2], %s35
  %s37 = smul.u32 1, 1
  %s38 = sshll.u32 %s37, 4
  %39 = dma.done %s22, %s38
  %40 = vsyncmov [#allocation2]
  %s41 = vpop.sfrf %40
  %p42 = scmp.eq.s32.totalorder %s41, 0
  %p43 = pneg %p42
  %45 = shalt.err (%p43)
  %s46 = scalar_lea.sflag [#allocation2], 1
  %47 = vsyncmov %s46
  %s48 = vpop.sfrf %47
  %p49 = scmp.eq.s32.totalorder %s48, 0
  %p50 = pneg %p49
  %52 = shalt.err (%p50)

</llo_original>
